<compile_context>
chip_gen: v7x
topology: tpu7x:2x2x1
jax: 0.10.0
libtpu: 0.0.40
codegen_flags: <defaults>
</compile_context>

<pallas_src>
import jax
import jax.numpy as jnp
from jax import lax
from jax.experimental import pallas as pl
from jax.experimental.pallas import tpu as pltpu

# ---- SNN hyper-parameters (deterministic, in-script) ----
T_STEPS = 8      # number of LIF time steps
BETA = 0.9       # membrane leak factor
V_TH = 1.0       # firing threshold (folded: spk * V_TH == spk)

_NEG_INF = -1e30  # pad-class bias (keeps log_softmax NaN-free)


def _round_up(n, m):
    return ((n + m - 1) // m) * m


def model_kernel(x_ref, we_ref, be_ref, wd_ref, bd_ref, out_ref, cur_acc):
    """One (batch-tile, k-tile) grid step.

    x_ref  : (TB, TK)        bf16 flattened-input tile
    we_ref : (TK, HID_P)     bf16 encoder weight tile, (K, N) layout
    be_ref : (1, HID_P)      f32 encoder bias
    wd_ref : (HID_P, NCLS_P) bf16 decoder weight, (K, N) layout
    bd_ref : (1, NCLS_P)     f32 decoder bias (pad classes = -1e30)
    out_ref: (TB, NCLS_P)    f32 log_p_y tile
    cur_acc: (TB, HID_P)     f32 encoder-output accumulator (VMEM scratch)
    """
    k = pl.program_id(1)

    # ---- encoder: tiled Linear, canonical (M,K)x(K,N) MXU matmul ----
    @pl.when(k == 0)
    def _():
        cur_acc[...] = jnp.zeros_like(cur_acc)

    cur_acc[...] += jnp.dot(x_ref[...], we_ref[...],
                            preferred_element_type=jnp.float32)

    # ---- on the last K step: bias, LIF dynamics, decoder, log_softmax ----
    @pl.when(k == pl.num_programs(1) - 1)
    def _():
        cur = cur_acc[...] + be_ref[...]              # f32, (TB, HID_P)

        def lif_step(_, carry):
            v, s = carry
            v = BETA * v + cur                        # leaky integrate
            spk = (v >= V_TH).astype(jnp.float32)     # fire (0/1)
            return v - spk, s + spk                   # soft reset (V_TH=1.0)
        # TODO(synk): bf16 LIF state would halve VALU work on v6e/v7x but can
        #             flip single spikes near threshold; kept f32 (v5e-safe).

        zero = jnp.zeros_like(cur)
        _, spk_sum = lax.fori_loop(0, T_STEPS, lif_step, (zero, zero),
                                   unroll=True)
        rate = spk_sum * (1.0 / T_STEPS)              # exact in bf16 (k/8)

        logits = jnp.dot(rate.astype(jnp.bfloat16), wd_ref[...],
                         preferred_element_type=jnp.float32) + bd_ref[...]

        m = jnp.max(logits, axis=-1, keepdims=True)
        z = logits - m
        lse = jnp.log(jnp.sum(jnp.exp(z), axis=-1, keepdims=True))
        out_ref[...] = (z - lse).astype(out_ref.dtype)


def prepare_params(w_enc, b_enc, w_dec, b_dec):
    """One-time (outside the forward): transpose to (K, N), pad, cast to bf16."""
    hid, d_in = w_enc.shape
    n_cls = w_dec.shape[0]
    hid_p = _round_up(hid, 128)
    d_in_p = _round_up(d_in, 128)
    n_cls_p = _round_up(n_cls, 128)

    # (K, N) layout so the kernel contracts LHS dim 1 with RHS dim 0 (no
    # per-step relayout of the weight tile inside the kernel).
    we = (jnp.zeros((d_in_p, hid_p), jnp.float32)
          .at[:d_in, :hid].set(w_enc.T).astype(jnp.bfloat16))
    be = jnp.zeros((1, hid_p), jnp.float32).at[0, :hid].set(b_enc)
    wd = (jnp.zeros((hid_p, n_cls_p), jnp.float32)
          .at[:hid, :n_cls].set(w_dec.T).astype(jnp.bfloat16))
    bd = jnp.full((1, n_cls_p), _NEG_INF, jnp.float32).at[0, :n_cls].set(b_dec)

    return dict(we=we, be=be, wd=wd, bd=bd,
                d_in=d_in, hid=hid, n_cls=n_cls,
                d_in_p=d_in_p, hid_p=hid_p, n_cls_p=n_cls_p)


def _vmem_capacity_bytes():
    try:
        return int(pltpu.get_tpu_info().vmem_capacity_bytes)
    except Exception:
        return 64 << 20   # conservative fallback (v7x-sized)


def _select_tiles(B, d_in_p, hid_p, n_cls_p):
    """Pick (tb, tk, vmem_limit_bytes) against the per-generation VMEM budget."""
    phys = _vmem_capacity_bytes()
    budget = int(phys * 0.45)        # headroom for compiler-internal scratch

    def vmem_need(tb, tk):
        return (2 * tb * tk * 2             # x tile, double-buffered, bf16
                + 2 * tk * hid_p * 2        # encoder weight tile, bf16
                + 2 * hid_p * n_cls_p * 2   # decoder weight (resident), bf16
                + 2 * tb * n_cls_p * 4      # output tile, f32
                + tb * hid_p * 4            # f32 accumulator scratch
                + 4 * (hid_p + n_cls_p) * 4)  # biases

    # contraction tile: largest divisor of the (padded) feature dim
    tk_cands = [t for t in (1024, 512, 256, 128) if d_in_p % t == 0]
    # batch tile: multiple of 16 (bf16 sublane packing), no larger than needed
    b16 = _round_up(B, 16)
    tb_max = min(512, b16)
    tb_cands = list(range(tb_max, 0, -16))

    tb, tk = 16, tk_cands[-1]
    done = False
    for cand_tb in tb_cands:
        for cand_tk in tk_cands:
            if vmem_need(cand_tb, cand_tk) <= budget:
                tb, tk = cand_tb, cand_tk
                done = True
                break
        if done:
            break
    # TODO(synk): for very large hid_p an additional hidden (N) grid axis
    #             would be needed; tk already drops to keep the weight block
    #             inside the budget.

    # v7x megacore: prefer >= 2 steps on the parallel batch axis so both
    # TensorCores get work (harmless on single-TC chips).
    if pl.cdiv(b16, tb) < 2 and tb >= 32:
        tb = max(16, (tb // 2) // 16 * 16)

    vmem_limit = min(phys, max(vmem_need(tb, tk) + (8 << 20), 32 << 20))
    return tb, tk, vmem_limit


def model_forward(x, params):
    """x: (B, C, H, W) float32. Returns log_p_y: (B, num_classes) float32."""
    B = x.shape[0]
    d_in, d_in_p = params["d_in"], params["d_in_p"]
    hid_p = params["hid_p"]
    n_cls, n_cls_p = params["n_cls"], params["n_cls_p"]

    tb, tk, vmem_limit = _select_tiles(B, d_in_p, hid_p, n_cls_p)
    b_pad = _round_up(B, tb)

    # flatten + bf16 cast (halves x DMA bytes; accumulation stays f32)
    x_flat = x.reshape(B, -1).astype(jnp.bfloat16)
    pad_b, pad_k = b_pad - B, d_in_p - d_in
    if pad_b or pad_k:
        # Only pads the axes that need it; when d_in % 128 == 0 and B is a
        # tile multiple this branch is skipped entirely (no extra HBM copy).
        x_flat = jnp.pad(x_flat, ((0, pad_b), (0, pad_k)))

    grid = (b_pad // tb, d_in_p // tk)

    out = pl.pallas_call(
        model_kernel,
        out_shape=jax.ShapeDtypeStruct((b_pad, n_cls_p), jnp.float32),
        grid_spec=pltpu.PrefetchScalarGridSpec(
            num_scalar_prefetch=0,
            grid=grid,
            in_specs=[
                pl.BlockSpec((tb, tk), lambda b, k: (b, k)),           # x
                pl.BlockSpec((tk, hid_p), lambda b, k: (k, 0)),        # w_enc
                pl.BlockSpec((1, hid_p), lambda b, k: (0, 0)),         # b_enc
                pl.BlockSpec((hid_p, n_cls_p), lambda b, k: (0, 0)),   # w_dec
                pl.BlockSpec((1, n_cls_p), lambda b, k: (0, 0)),       # b_dec
            ],
            out_specs=pl.BlockSpec((tb, n_cls_p), lambda b, k: (b, 0)),
            scratch_shapes=[pltpu.VMEM((tb, hid_p), jnp.float32)],
        ),
        # The k (contraction) axis MUST stay the last grid axis and
        # "arbitrary": cur_acc correctness relies on it running sequentially
        # per batch tile. Never mark it "parallel".
        compiler_params=pltpu.CompilerParams(
            dimension_semantics=("parallel", "arbitrary"),
            vmem_limit_bytes=vmem_limit),
    )(x_flat, params["we"], params["be"], params["wd"], params["bd"])

    return out[:B, :n_cls]


def reference_forward(x, w_enc, b_enc, w_dec, b_dec):
    """Pure-JAX reference mirroring the kernel's bf16 matmul operands."""
    B = x.shape[0]
    xf = x.reshape(B, -1)
    cur = jnp.dot(xf.astype(jnp.bfloat16).astype(jnp.float32),
                  w_enc.astype(jnp.bfloat16).astype(jnp.float32).T) + b_enc
    v = jnp.zeros_like(cur)
    s = jnp.zeros_like(cur)
    for _ in range(T_STEPS):
        v = BETA * v + cur
        spk = (v >= V_TH).astype(jnp.float32)
        v = v - spk * V_TH
        s = s + spk
    rate = s / T_STEPS
    logits = jnp.dot(rate.astype(jnp.bfloat16).astype(jnp.float32),
                     w_dec.astype(jnp.bfloat16).astype(jnp.float32).T) + b_dec
    return jax.nn.log_softmax(logits, axis=-1)


if __name__ == "__main__":
    key = jax.random.PRNGKey(0)
    k_x, k_we, k_be, k_wd, k_bd = jax.random.split(key, 5)

    # small shapes consistent with the forward: NCHW image, flattened inside
    B, C, H, W = 2, 4, 16, 16
    d_in = C * H * W          # 1024
    hidden = 32
    n_classes = 10

    x = jax.random.normal(k_x, (B, C, H, W), dtype=jnp.float32)

    # deterministic parameter init (shapes follow torch.nn.Linear: (out, in))
    lim_e = 1.0 / jnp.sqrt(d_in)
    w_enc = jax.random.uniform(k_we, (hidden, d_in), jnp.float32, -lim_e, lim_e)
    b_enc = jax.random.uniform(k_be, (hidden,), jnp.float32, -lim_e, lim_e)
    lim_d = 1.0 / jnp.sqrt(hidden)
    w_dec = jax.random.uniform(k_wd, (n_classes, hidden), jnp.float32, -lim_d, lim_d)
    b_dec = jax.random.uniform(k_bd, (n_classes,), jnp.float32, -lim_d, lim_d)

    params = prepare_params(w_enc, b_enc, w_dec, b_dec)   # one-time pad + cast
    log_p_y = model_forward(x, params)
    jax.block_until_ready(log_p_y)

    assert log_p_y.shape == (B, n_classes)
    # rows of exp(log_p_y) must sum to 1 (valid log-probabilities)
    row_sums = jnp.sum(jnp.exp(log_p_y), axis=-1)
    assert jnp.allclose(row_sums, 1.0, atol=1e-5)

    # sanity check against a pure-JAX reference (loose tol: bf16 matmuls +
    # possible single-spike flips near threshold)
    ref = reference_forward(x, w_enc, b_enc, w_dec, b_dec)
    assert jnp.allclose(log_p_y, ref, atol=1e-1), (
        "max err %f" % float(jnp.max(jnp.abs(log_p_y - ref))))

    print("KERNEL_OK")
</pallas_src>

<mosaic_0001>
module attributes {stable_mosaic.version = 11 : i64} {
  func.func @model_kernel(%arg0: i32, %arg1: i32, %arg2: memref<16x1024xbf16, #tpu.memory_space<vmem>>, %arg3: memref<1024x128xbf16, #tpu.memory_space<vmem>>, %arg4: memref<1x128xf32, #tpu.memory_space<vmem>>, %arg5: memref<128x128xbf16, #tpu.memory_space<vmem>>, %arg6: memref<1x128xf32, #tpu.memory_space<vmem>>, %arg7: memref<16x128xf32, #tpu.memory_space<vmem>>, %arg8: memref<16x128xf32, #tpu.memory_space<vmem>>) attributes {dimension_semantics = [#tpu.dimension_semantics<parallel>, #tpu.dimension_semantics<arbitrary>], iteration_bounds = array<i64: 1, 1>, scalar_prefetch = 0 : i64, scratch_operands = 1 : i64, tpu.core_type = #tpu.core_type<tc>, window_params = [{transform_indices = @transform_0, window_bounds = array<i64: 16, 1024>}, {transform_indices = @transform_1, window_bounds = array<i64: 1024, 128>}, {pipeline_mode = #tpu.pipeline_mode<synchronous>, transform_indices = @transform_2, window_bounds = array<i64: 1, 128>}, {pipeline_mode = #tpu.pipeline_mode<synchronous>, transform_indices = @transform_3, window_bounds = array<i64: 128, 128>}, {pipeline_mode = #tpu.pipeline_mode<synchronous>, transform_indices = @transform_4, window_bounds = array<i64: 1, 128>}, {transform_indices = @transform_5, window_bounds = array<i64: 16, 128>}]} {
    %c0_i32 = arith.constant 0 : i32
    %0 = arith.cmpi eq, %arg1, %c0_i32 : i32
    %1 = arith.extui %0 : i1 to i32
    %c0_i32_0 = arith.constant 0 : i32
    %2 = arith.cmpi ne, %1, %c0_i32_0 : i32
    scf.if %2 {
      %cst_10 = arith.constant 0.000000e+00 : f32
      %12 = vector.broadcast %cst_10 : f32 to vector<16x128xf32>
      %c0_11 = arith.constant 0 : index
      %c0_12 = arith.constant 0 : index
      %13 = vector.load %arg8[%c0_11, %c0_12] : memref<16x128xf32, #tpu.memory_space<vmem>>, vector<16x128xf32>
      tpu.vector_store %arg8[%c0_11, %c0_12], %12 {strides = array<i32>} : memref<16x128xf32, #tpu.memory_space<vmem>>, vector<16x128xf32>,
    } else {
    }
    %c0 = arith.constant 0 : index
    %c0_1 = arith.constant 0 : index
    %3 = vector.load %arg8[%c0, %c0_1] : memref<16x128xf32, #tpu.memory_space<vmem>>, vector<16x128xf32>
    %c0_2 = arith.constant 0 : index
    %c0_3 = arith.constant 0 : index
    %4 = vector.load %arg2[%c0_2, %c0_3] : memref<16x1024xbf16, #tpu.memory_space<vmem>>, vector<16x1024xbf16>
    %c0_4 = arith.constant 0 : index
    %c0_5 = arith.constant 0 : index
    %5 = vector.load %arg3[%c0_4, %c0_5] : memref<1024x128xbf16, #tpu.memory_space<vmem>>, vector<1024x128xbf16>
    %cst = arith.constant dense<0.000000e+00> : vector<16x128xf32>
    %6 = tpu.matmul %4, %5, %cst {dimension_numbers = #tpu.dot_dimension_numbers<[1], [0], [0], [1], [0, 0, 1, 1], [], []>} : vector<16x1024xbf16>, vector<1024x128xbf16>, vector<16x128xf32> -> vector<16x128xf32>
    %7 = arith.addf %3, %6 : vector<16x128xf32>
    %c0_6 = arith.constant 0 : index
    %c0_7 = arith.constant 0 : index
    %8 = vector.load %arg8[%c0_6, %c0_7] : memref<16x128xf32, #tpu.memory_space<vmem>>, vector<16x128xf32>
    tpu.vector_store %arg8[%c0_6, %c0_7], %7 {strides = array<i32>} : memref<16x128xf32, #tpu.memory_space<vmem>>, vector<16x128xf32>,
    %c0_i32_8 = arith.constant 0 : i32
    %9 = arith.cmpi eq, %arg1, %c0_i32_8 : i32
    %10 = arith.extui %9 : i1 to i32
    %c0_i32_9 = arith.constant 0 : i32
    %11 = arith.cmpi ne, %10, %c0_i32_9 : i32
    scf.if %11 {
      %c0_10 = arith.constant 0 : index
      %c0_11 = arith.constant 0 : index
      %12 = vector.load %arg8[%c0_10, %c0_11] : memref<16x128xf32, #tpu.memory_space<vmem>>, vector<16x128xf32>
      %c0_12 = arith.constant 0 : index
      %c0_13 = arith.constant 0 : index
      %13 = vector.load %arg4[%c0_12, %c0_13] : memref<1x128xf32, #tpu.memory_space<vmem>>, vector<1x128xf32>
      %14 = vector.broadcast %13 : vector<1x128xf32> to vector<16x128xf32>
      %15 = arith.addf %12, %14 : vector<16x128xf32>
      %cst_14 = arith.constant 0.000000e+00 : f32
      %16 = vector.broadcast %cst_14 : f32 to vector<16x128xf32>
      %c0_i32_15 = arith.constant 0 : i32
      %cst_16 = arith.constant 0.899999976 : f32
      %17 = vector.broadcast %cst_16 : f32 to vector<16x128xf32>
      %18 = arith.mulf %17, %16 : vector<16x128xf32>
      %19 = arith.addf %18, %15 : vector<16x128xf32>
      %cst_17 = arith.constant 1.000000e+00 : f32
      %20 = vector.broadcast %cst_17 : f32 to vector<16x128xf32>
      %21 = arith.cmpf oge, %19, %20 : vector<16x128xf32>
      %22 = arith.extui %21 : vector<16x128xi1> to vector<16x128xi32>
      %23 = arith.sitofp %22 : vector<16x128xi32> to vector<16x128xf32>
      %24 = arith.subf %19, %23 : vector<16x128xf32>
      %25 = arith.addf %16, %23 : vector<16x128xf32>
      %c1_i32 = arith.constant 1 : i32
      %cst_18 = arith.constant 0.899999976 : f32
      %26 = vector.broadcast %cst_18 : f32 to vector<16x128xf32>
      %27 = arith.mulf %26, %24 : vector<16x128xf32>
      %28 = arith.addf %27, %15 : vector<16x128xf32>
      %cst_19 = arith.constant 1.000000e+00 : f32
      %29 = vector.broadcast %cst_19 : f32 to vector<16x128xf32>
      %30 = arith.cmpf oge, %28, %29 : vector<16x128xf32>
      %31 = arith.extui %30 : vector<16x128xi1> to vector<16x128xi32>
      %32 = arith.sitofp %31 : vector<16x128xi32> to vector<16x128xf32>
      %33 = arith.subf %28, %32 : vector<16x128xf32>
      %34 = arith.addf %25, %32 : vector<16x128xf32>
      %c2_i32 = arith.constant 2 : i32
      %cst_20 = arith.constant 0.899999976 : f32
      %35 = vector.broadcast %cst_20 : f32 to vector<16x128xf32>
      %36 = arith.mulf %35, %33 : vector<16x128xf32>
      %37 = arith.addf %36, %15 : vector<16x128xf32>
      %cst_21 = arith.constant 1.000000e+00 : f32
      %38 = vector.broadcast %cst_21 : f32 to vector<16x128xf32>
      %39 = arith.cmpf oge, %37, %38 : vector<16x128xf32>
      %40 = arith.extui %39 : vector<16x128xi1> to vector<16x128xi32>
      %41 = arith.sitofp %40 : vector<16x128xi32> to vector<16x128xf32>
      %42 = arith.subf %37, %41 : vector<16x128xf32>
      %43 = arith.addf %34, %41 : vector<16x128xf32>
      %c3_i32 = arith.constant 3 : i32
      %cst_22 = arith.constant 0.899999976 : f32
      %44 = vector.broadcast %cst_22 : f32 to vector<16x128xf32>
      %45 = arith.mulf %44, %42 : vector<16x128xf32>
      %46 = arith.addf %45, %15 : vector<16x128xf32>
      %cst_23 = arith.constant 1.000000e+00 : f32
      %47 = vector.broadcast %cst_23 : f32 to vector<16x128xf32>
      %48 = arith.cmpf oge, %46, %47 : vector<16x128xf32>
      %49 = arith.extui %48 : vector<16x128xi1> to vector<16x128xi32>
      %50 = arith.sitofp %49 : vector<16x128xi32> to vector<16x128xf32>
      %51 = arith.subf %46, %50 : vector<16x128xf32>
      %52 = arith.addf %43, %50 : vector<16x128xf32>
      %c4_i32 = arith.constant 4 : i32
      %cst_24 = arith.constant 0.899999976 : f32
      %53 = vector.broadcast %cst_24 : f32 to vector<16x128xf32>
      %54 = arith.mulf %53, %51 : vector<16x128xf32>
      %55 = arith.addf %54, %15 : vector<16x128xf32>
      %cst_25 = arith.constant 1.000000e+00 : f32
      %56 = vector.broadcast %cst_25 : f32 to vector<16x128xf32>
      %57 = arith.cmpf oge, %55, %56 : vector<16x128xf32>
      %58 = arith.extui %57 : vector<16x128xi1> to vector<16x128xi32>
      %59 = arith.sitofp %58 : vector<16x128xi32> to vector<16x128xf32>
      %60 = arith.subf %55, %59 : vector<16x128xf32>
      %61 = arith.addf %52, %59 : vector<16x128xf32>
      %c5_i32 = arith.constant 5 : i32
      %cst_26 = arith.constant 0.899999976 : f32
      %62 = vector.broadcast %cst_26 : f32 to vector<16x128xf32>
      %63 = arith.mulf %62, %60 : vector<16x128xf32>
      %64 = arith.addf %63, %15 : vector<16x128xf32>
      %cst_27 = arith.constant 1.000000e+00 : f32
      %65 = vector.broadcast %cst_27 : f32 to vector<16x128xf32>
      %66 = arith.cmpf oge, %64, %65 : vector<16x128xf32>
      %67 = arith.extui %66 : vector<16x128xi1> to vector<16x128xi32>
      %68 = arith.sitofp %67 : vector<16x128xi32> to vector<16x128xf32>
      %69 = arith.subf %64, %68 : vector<16x128xf32>
      %70 = arith.addf %61, %68 : vector<16x128xf32>
      %c6_i32 = arith.constant 6 : i32
      %cst_28 = arith.constant 0.899999976 : f32
      %71 = vector.broadcast %cst_28 : f32 to vector<16x128xf32>
      %72 = arith.mulf %71, %69 : vector<16x128xf32>
      %73 = arith.addf %72, %15 : vector<16x128xf32>
      %cst_29 = arith.constant 1.000000e+00 : f32
      %74 = vector.broadcast %cst_29 : f32 to vector<16x128xf32>
      %75 = arith.cmpf oge, %73, %74 : vector<16x128xf32>
      %76 = arith.extui %75 : vector<16x128xi1> to vector<16x128xi32>
      %77 = arith.sitofp %76 : vector<16x128xi32> to vector<16x128xf32>
      %78 = arith.subf %73, %77 : vector<16x128xf32>
      %79 = arith.addf %70, %77 : vector<16x128xf32>
      %c7_i32 = arith.constant 7 : i32
      %cst_30 = arith.constant 0.899999976 : f32
      %80 = vector.broadcast %cst_30 : f32 to vector<16x128xf32>
      %81 = arith.mulf %80, %78 : vector<16x128xf32>
      %82 = arith.addf %81, %15 : vector<16x128xf32>
      %cst_31 = arith.constant 1.000000e+00 : f32
      %83 = vector.broadcast %cst_31 : f32 to vector<16x128xf32>
      %84 = arith.cmpf oge, %82, %83 : vector<16x128xf32>
      %85 = arith.extui %84 : vector<16x128xi1> to vector<16x128xi32>
      %86 = arith.sitofp %85 : vector<16x128xi32> to vector<16x128xf32>
      %87 = arith.subf %82, %86 : vector<16x128xf32>
      %88 = arith.addf %79, %86 : vector<16x128xf32>
      %cst_32 = arith.constant 1.250000e-01 : f32
      %89 = vector.broadcast %cst_32 : f32 to vector<16x128xf32>
      %90 = arith.mulf %88, %89 : vector<16x128xf32>
      %91 = arith.truncf %90 : vector<16x128xf32> to vector<16x128xbf16>
      %c0_33 = arith.constant 0 : index
      %c0_34 = arith.constant 0 : index
      %92 = vector.load %arg5[%c0_33, %c0_34] : memref<128x128xbf16, #tpu.memory_space<vmem>>, vector<128x128xbf16>
      %cst_35 = arith.constant dense<0.000000e+00> : vector<16x128xf32>
      %93 = tpu.matmul %91, %92, %cst_35 {dimension_numbers = #tpu.dot_dimension_numbers<[1], [0], [0], [1], [0, 0, 1, 1], [], []>} : vector<16x128xbf16>, vector<128x128xbf16>, vector<16x128xf32> -> vector<16x128xf32>
      %c0_36 = arith.constant 0 : index
      %c0_37 = arith.constant 0 : index
      %94 = vector.load %arg6[%c0_36, %c0_37] : memref<1x128xf32, #tpu.memory_space<vmem>>, vector<1x128xf32>
      %95 = vector.broadcast %94 : vector<1x128xf32> to vector<16x128xf32>
      %96 = arith.addf %93, %95 : vector<16x128xf32>
      %cst_38 = arith.constant dense<0xFF800000> : vector<16xf32>
      %97 = vector.multi_reduction <maximumf>, %96, %cst_38 [1] : vector<16x128xf32> to vector<16xf32>
      %98 = vector.shape_cast %97 : vector<16xf32> to vector<16x1xf32>
      %99 = vector.broadcast %98 : vector<16x1xf32> to vector<16x128xf32>
      %100 = arith.subf %96, %99 : vector<16x128xf32>
      %101 = math.exp %100 : vector<16x128xf32>
      %cst_39 = arith.constant dense<0.000000e+00> : vector<16xf32>
      %102 = vector.multi_reduction <add>, %101, %cst_39 [1] : vector<16x128xf32> to vector<16xf32>
      %103 = vector.shape_cast %102 : vector<16xf32> to vector<16x1xf32>
      %104 = math.log %103 : vector<16x1xf32>
      %105 = vector.broadcast %104 : vector<16x1xf32> to vector<16x128xf32>
      %106 = arith.subf %100, %105 : vector<16x128xf32>
      %c0_40 = arith.constant 0 : index
      %c0_41 = arith.constant 0 : index
      %107 = vector.load %arg7[%c0_40, %c0_41] : memref<16x128xf32, #tpu.memory_space<vmem>>, vector<16x128xf32>
      tpu.vector_store %arg7[%c0_40, %c0_41], %106 {strides = array<i32>} : memref<16x128xf32, #tpu.memory_space<vmem>>, vector<16x128xf32>,
    } else {
    }
    return
  }
  func.func @transform_0(%arg0: i32, %arg1: i32) -> (i32, i32) {
    %c0_i32 = arith.constant 0 : i32
    return %arg0, %arg1 : i32, i32
  }
  func.func @transform_1(%arg0: i32, %arg1: i32) -> (i32, i32) {
    %c0_i32 = arith.constant 0 : i32
    %c0_i32_0 = arith.constant 0 : i32
    return %arg1, %c0_i32 : i32, i32
  }
  func.func @transform_2(%arg0: i32, %arg1: i32) -> (i32, i32) {
    %c0_i32 = arith.constant 0 : i32
    %c0_i32_0 = arith.constant 0 : i32
    %c0_i32_1 = arith.constant 0 : i32
    return %c0_i32, %c0_i32_0 : i32, i32
  }
  func.func @transform_3(%arg0: i32, %arg1: i32) -> (i32, i32) {
    %c0_i32 = arith.constant 0 : i32
    %c0_i32_0 = arith.constant 0 : i32
    %c0_i32_1 = arith.constant 0 : i32
    return %c0_i32, %c0_i32_0 : i32, i32
  }
  func.func @transform_4(%arg0: i32, %arg1: i32) -> (i32, i32) {
    %c0_i32 = arith.constant 0 : i32
    %c0_i32_0 = arith.constant 0 : i32
    %c0_i32_1 = arith.constant 0 : i32
    return %c0_i32, %c0_i32_0 : i32, i32
  }
  func.func @transform_5(%arg0: i32, %arg1: i32) -> (i32, i32) {
    %c0_i32 = arith.constant 0 : i32
    %c0_i32_0 = arith.constant 0 : i32
    return %arg0, %c0_i32 : i32, i32
  }
}

</mosaic_0001>

<llo_original>
// kernel: tpu_custom_call.1
$region0: #{tpu_custom_call.1}
  #allocation0 [shape = 'u32[]', space=smem, size = 0x4, offset = 0x4, fixed_abs, tag = 'smem constant byte address 0x4 - core index']
  #allocation1 [shape = 'u32[144,128]{1,0:T(1,128)}', space=vmem, size = 0x12000, scoped, tag = 'internal scratch']
  #allocation2 [shape = 'f32[16,128]{1,0:T(8,128)}', space=vmem, size = 0x2000, scoped, tag = 'scratch operand']
  %s0 = inlined_call_operand.hbm [shape: bf16[16,1024], index: 0, kind: input, shape index: {}]
  %s1 = inlined_call_operand.hbm [shape: bf16[1024,128], index: 1, kind: input, shape index: {}]
  %s2 = inlined_call_operand.vmem [shape: f32[1,128], index: 2, kind: input, shape index: {}]
  %s3 = inlined_call_operand.hbm [shape: bf16[128,128], index: 3, kind: input, shape index: {}]
  %s4 = inlined_call_operand.vmem [shape: f32[1,128], index: 4, kind: input, shape index: {}]
  %s5 = inlined_call_operand.hbm [shape: f32[16,128], index: 5, kind: output, shape index: {}]
  %s6 = sld [smem:[#allocation0]]
  $region50: #{tpu_custom_call.1} parent=0
    _
  %s8 = ssub.s32 1, %s6
  %s9 = scalar_select 0, %s8, %s6
  $region1: #{tpu_custom_call.1} parent=0
    #allocation3 [shape = 'u8[32768]{0}', space=vmem, size = 0x8000, scoped, tag = 'input window, operand 0, single buffered']
    #allocation4 [shape = 's32[1]{0}', space=sflag, size = 0x4, scoped, tag = 'scoped memory for tpu_custom_call.1']
    #allocation5 [shape = 's32[1]{0}', space=sflag, size = 0x4, scoped, tag = 'scoped memory for tpu_custom_call.1']
    #allocation6 [shape = 'u8[262144]{0}', space=vmem, size = 0x40000, scoped, tag = 'input window, operand 1, single buffered']
    #allocation7 [shape = 's32[1]{0}', space=sflag, size = 0x4, scoped, tag = 'scoped memory for tpu_custom_call.1']
    #allocation8 [shape = 'u8[32768]{0}', space=vmem, size = 0x8000, scoped, tag = 'input window, operand 3, single buffered']
    #allocation9 [shape = 'u8[8192]{0}', space=vmem, size = 0x2000, scoped, tag = 'output window, operand 0, single buffered']
    %10 = vsyncpa [#allocation4], 0
    %11 = vsyncpa [#allocation7], 0
    %12 = vsyncpa [#allocation5], 0
    // Predicated region
    $region2: #{tpu_custom_call.1} parent=1 // pred_check
      _
    $region3: #{tpu_custom_call.1} parent=1 // pred_check_branch
      %14 = sbr.rel (0) target = $region5
    $region4: #{tpu_custom_call.1} parent=1 // pred_region
      %s16 = ssub.s32 1024, 1024
      %17 = vsyncadd [#allocation4], %s16
      %s18 = sshll.u32 [#allocation3], 4
      %s19 = int_to_ptr.vmem [resolvable:$true] %s18
      %24 = dma.hbm_to_vmem [thread:$0]  %s0, 1024, %s19, [#allocation4], 512, 512, 32
    $region5: #{tpu_custom_call.1} parent=1 // pred_fallthru
      _
    // Predicated region
    $region6: #{tpu_custom_call.1} parent=1 // pred_check
      _
    $region7: #{tpu_custom_call.1} parent=1 // pred_check_branch
      %26 = sbr.rel (0) target = $region9
    $region8: #{tpu_custom_call.1} parent=1 // pred_region
      %s28 = ssub.s32 8192, 8192
      %29 = vsyncadd [#allocation7], %s28
      %s30 = sshll.u32 [#allocation6], 4
      %s31 = int_to_ptr.vmem [resolvable:$true] %s30
      %36 = dma.hbm_to_vmem [thread:$0]  %s1, 8192, %s31, [#allocation7], 64, 64, 4
    $region9: #{tpu_custom_call.1} parent=1 // pred_fallthru
      _
    // Predicated region
    $region10: #{tpu_custom_call.1} parent=1 // pred_check
      _
    $region11: #{tpu_custom_call.1} parent=1 // pred_check_branch
      %38 = sbr.rel (0) target = $region13
    $region12: #{tpu_custom_call.1} parent=1 // pred_region
      _
    $region13: #{tpu_custom_call.1} parent=1 // pred_fallthru
      _
    // Predicated region
    $region14: #{tpu_custom_call.1} parent=1 // pred_check
      _
    $region15: #{tpu_custom_call.1} parent=1 // pred_check_branch
      %40 = sbr.rel (0) target = $region17
    $region16: #{tpu_custom_call.1} parent=1 // pred_region
      %s42 = ssub.s32 1024, 1024
      %43 = vsyncadd [#allocation7], %s42
      %s44 = sshll.u32 [#allocation8], 4
      %s45 = int_to_ptr.vmem [resolvable:$true] %s44
      %50 = dma.hbm_to_vmem [thread:$0]  %s3, 1024, %s45, [#allocation7], 64, 64, 4
    $region17: #{tpu_custom_call.1} parent=1 // pred_fallthru
      _
    // Predicated region
    $region18: #{tpu_custom_call.1} parent=1 // pred_check
      _
    $region19: #{tpu_custom_call.1} parent=1 // pred_check_branch
      %52 = sbr.rel (0) target = $region21
    $region20: #{tpu_custom_call.1} parent=1 // pred_region
      _
    $region21: #{tpu_custom_call.1} parent=1 // pred_fallthru
      _
    // Predicated region
    $region22: #{tpu_custom_call.1} parent=1 // pred_check
      _
    $region23: #{tpu_custom_call.1} parent=1 // pred_check_branch
      %54 = sbr.rel (0) target = $region25
    $region24: #{tpu_custom_call.1} parent=1 // pred_region
      %55 = dma.done [#allocation4], 1024
    $region25: #{tpu_custom_call.1} parent=1 // pred_fallthru
      _
    // Predicated region
    $region26: #{tpu_custom_call.1} parent=1 // pred_check
      _
    $region27: #{tpu_custom_call.1} parent=1 // pred_check_branch
      %57 = sbr.rel (0) target = $region29
    $region28: #{tpu_custom_call.1} parent=1 // pred_region
      %58 = dma.done [#allocation7], 8192
    $region29: #{tpu_custom_call.1} parent=1 // pred_fallthru
      _
    // Predicated region
    $region30: #{tpu_custom_call.1} parent=1 // pred_check
      _
    $region31: #{tpu_custom_call.1} parent=1 // pred_check_branch
      %60 = sbr.rel (0) target = $region33
    $region32: #{tpu_custom_call.1} parent=1 // pred_region
      %61 = dma.done [#allocation7], 1024
    $region33: #{tpu_custom_call.1} parent=1 // pred_fallthru
      _
    %p63 = scmp.eq.s32.totalorder 0, 0
    // Predicated region
    $region34: #{tpu_custom_call.1} parent=1 // pred_check
      %p64 = pneg %p63
    $region35: #{tpu_custom_call.1} parent=1 // pred_check_branch
      %66 = sbr.rel (%p64) target = $region37
    $region36: #{tpu_custom_call.1} parent=1 // pred_region
      %67 = vst [vmem:[#allocation2] sm:$0xff] 0.0
      %68 = vst [vmem:[#allocation2 + $0x8] sm:$0xff] 0.0
    $region37: #{tpu_custom_call.1} parent=1 // pred_fallthru
      _
    %v69 = vld [vmem:[#allocation2] sm:$0xff]
    %v70 = vld [vmem:[#allocation2 + $0x8] sm:$0xff]
    %v71 = vld [vmem:[#allocation3] sm:$0xff]
    %v72 = vld [vmem:[#allocation3 + $0x8] sm:$0xff]
    %v73 = vld [vmem:[#allocation3 + $0x10] sm:$0xff]
    %v74 = vld [vmem:[#allocation3 + $0x18] sm:$0xff]
    %v75 = vld [vmem:[#allocation3 + $0x20] sm:$0xff]
    %v76 = vld [vmem:[#allocation3 + $0x28] sm:$0xff]
    %v77 = vld [vmem:[#allocation3 + $0x30] sm:$0xff]
    %v78 = vld [vmem:[#allocation3 + $0x38] sm:$0xff]
    %v79 = vld [vmem:[#allocation6] sm:$0xf]
    %v80 = vld [vmem:[#allocation6 + $0x4] sm:$0xf]
    %v81 = vld [vmem:[#allocation6 + $0x8] sm:$0xf]
    %v82 = vld [vmem:[#allocation6 + $0xc] sm:$0xf]
    %v83 = vld [vmem:[#allocation6 + $0x10] sm:$0xf]
    %v84 = vld [vmem:[#allocation6 + $0x14] sm:$0xf]
    %v85 = vld [vmem:[#allocation6 + $0x18] sm:$0xf]
    %v86 = vld [vmem:[#allocation6 + $0x1c] sm:$0xf]
    %v87 = vld [vmem:[#allocation6 + $0x20] sm:$0xf]
    %v88 = vld [vmem:[#allocation6 + $0x24] sm:$0xf]
    %v89 = vld [vmem:[#allocation6 + $0x28] sm:$0xf]
    %v90 = vld [vmem:[#allocation6 + $0x2c] sm:$0xf]
    %v91 = vld [vmem:[#allocation6 + $0x30] sm:$0xf]
    %v92 = vld [vmem:[#allocation6 + $0x34] sm:$0xf]
    %v93 = vld [vmem:[#allocation6 + $0x38] sm:$0xf]
    %v94 = vld [vmem:[#allocation6 + $0x3c] sm:$0xf]
    %v95 = vld [vmem:[#allocation6 + $0x40] sm:$0xf]
    %v96 = vld [vmem:[#allocation6 + $0x44] sm:$0xf]
    %v97 = vld [vmem:[#allocation6 + $0x48] sm:$0xf]
    %v98 = vld [vmem:[#allocation6 + $0x4c] sm:$0xf]
    %v99 = vld [vmem:[#allocation6 + $0x50] sm:$0xf]
    %v100 = vld [vmem:[#allocation6 + $0x54] sm:$0xf]
    %v101 = vld [vmem:[#allocation6 + $0x58] sm:$0xf]
    %v102 = vld [vmem:[#allocation6 + $0x5c] sm:$0xf]
    %v103 = vld [vmem:[#allocation6 + $0x60] sm:$0xf]
    %v104 = vld [vmem:[#allocation6 + $0x64] sm:$0xf]
    %v105 = vld [vmem:[#allocation6 + $0x68] sm:$0xf]
    %v106 = vld [vmem:[#allocation6 + $0x6c] sm:$0xf]
    %v107 = vld [vmem:[#allocation6 + $0x70] sm:$0xf]
    %v108 = vld [vmem:[#allocation6 + $0x74] sm:$0xf]
    %v109 = vld [vmem:[#allocation6 + $0x78] sm:$0xf]
    %v110 = vld [vmem:[#allocation6 + $0x7c] sm:$0xf]
    %v111 = vld [vmem:[#allocation6 + $0x80] sm:$0xf]
    %v112 = vld [vmem:[#allocation6 + $0x84] sm:$0xf]
    %v113 = vld [vmem:[#allocation6 + $0x88] sm:$0xf]
    %v114 = vld [vmem:[#allocation6 + $0x8c] sm:$0xf]
    %v115 = vld [vmem:[#allocation6 + $0x90] sm:$0xf]
    %v116 = vld [vmem:[#allocation6 + $0x94] sm:$0xf]
    %v117 = vld [vmem:[#allocation6 + $0x98] sm:$0xf]
    %v118 = vld [vmem:[#allocation6 + $0x9c] sm:$0xf]
    %v119 = vld [vmem:[#allocation6 + $0xa0] sm:$0xf]
    %v120 = vld [vmem:[#allocation6 + $0xa4] sm:$0xf]
    %v121 = vld [vmem:[#allocation6 + $0xa8] sm:$0xf]
    %v122 = vld [vmem:[#allocation6 + $0xac] sm:$0xf]
    %v123 = vld [vmem:[#allocation6 + $0xb0] sm:$0xf]
    %v124 = vld [vmem:[#allocation6 + $0xb4] sm:$0xf]
    %v125 = vld [vmem:[#allocation6 + $0xb8] sm:$0xf]
    %v126 = vld [vmem:[#allocation6 + $0xbc] sm:$0xf]
    %v127 = vld [vmem:[#allocation6 + $0xc0] sm:$0xf]
    %v128 = vld [vmem:[#allocation6 + $0xc4] sm:$0xf]
    %v129 = vld [vmem:[#allocation6 + $0xc8] sm:$0xf]
    %v130 = vld [vmem:[#allocation6 + $0xcc] sm:$0xf]
    %v131 = vld [vmem:[#allocation6 + $0xd0] sm:$0xf]
    %v132 = vld [vmem:[#allocation6 + $0xd4] sm:$0xf]
    %v133 = vld [vmem:[#allocation6 + $0xd8] sm:$0xf]
    %v134 = vld [vmem:[#allocation6 + $0xdc] sm:$0xf]
    %v135 = vld [vmem:[#allocation6 + $0xe0] sm:$0xf]
    %v136 = vld [vmem:[#allocation6 + $0xe4] sm:$0xf]
    %v137 = vld [vmem:[#allocation6 + $0xe8] sm:$0xf]
    %v138 = vld [vmem:[#allocation6 + $0xec] sm:$0xf]
    %v139 = vld [vmem:[#allocation6 + $0xf0] sm:$0xf]
    %v140 = vld [vmem:[#allocation6 + $0xf4] sm:$0xf]
    %v141 = vld [vmem:[#allocation6 + $0xf8] sm:$0xf]
    %v142 = vld [vmem:[#allocation6 + $0xfc] sm:$0xf]
    %v143 = vld [vmem:[#allocation6 + $0x100] sm:$0xf]
    %v144 = vld [vmem:[#allocation6 + $0x104] sm:$0xf]
    %v145 = vld [vmem:[#allocation6 + $0x108] sm:$0xf]
    %v146 = vld [vmem:[#allocation6 + $0x10c] sm:$0xf]
    %v147 = vld [vmem:[#allocation6 + $0x110] sm:$0xf]
    %v148 = vld [vmem:[#allocation6 + $0x114] sm:$0xf]
    %v149 = vld [vmem:[#allocation6 + $0x118] sm:$0xf]
    %v150 = vld [vmem:[#allocation6 + $0x11c] sm:$0xf]
    %v151 = vld [vmem:[#allocation6 + $0x120] sm:$0xf]
    %v152 = vld [vmem:[#allocation6 + $0x124] sm:$0xf]
    %v153 = vld [vmem:[#allocation6 + $0x128] sm:$0xf]
    %v154 = vld [vmem:[#allocation6 + $0x12c] sm:$0xf]
    %v155 = vld [vmem:[#allocation6 + $0x130] sm:$0xf]
    %v156 = vld [vmem:[#allocation6 + $0x134] sm:$0xf]
    %v157 = vld [vmem:[#allocation6 + $0x138] sm:$0xf]
    %v158 = vld [vmem:[#allocation6 + $0x13c] sm:$0xf]
    %v159 = vld [vmem:[#allocation6 + $0x140] sm:$0xf]
    %v160 = vld [vmem:[#allocation6 + $0x144] sm:$0xf]
    %v161 = vld [vmem:[#allocation6 + $0x148] sm:$0xf]
    %v162 = vld [vmem:[#allocation6 + $0x14c] sm:$0xf]
    %v163 = vld [vmem:[#allocation6 + $0x150] sm:$0xf]
    %v164 = vld [vmem:[#allocation6 + $0x154] sm:$0xf]
    %v165 = vld [vmem:[#allocation6 + $0x158] sm:$0xf]
    %v166 = vld [vmem:[#allocation6 + $0x15c] sm:$0xf]
    %v167 = vld [vmem:[#allocation6 + $0x160] sm:$0xf]
    %v168 = vld [vmem:[#allocation6 + $0x164] sm:$0xf]
    %v169 = vld [vmem:[#allocation6 + $0x168] sm:$0xf]
    %v170 = vld [vmem:[#allocation6 + $0x16c] sm:$0xf]
    %v171 = vld [vmem:[#allocation6 + $0x170] sm:$0xf]
    %v172 = vld [vmem:[#allocation6 + $0x174] sm:$0xf]
    %v173 = vld [vmem:[#allocation6 + $0x178] sm:$0xf]
    %v174 = vld [vmem:[#allocation6 + $0x17c] sm:$0xf]
    %v175 = vld [vmem:[#allocation6 + $0x180] sm:$0xf]
    %v176 = vld [vmem:[#allocation6 + $0x184] sm:$0xf]
    %v177 = vld [vmem:[#allocation6 + $0x188] sm:$0xf]
    %v178 = vld [vmem:[#allocation6 + $0x18c] sm:$0xf]
    %v179 = vld [vmem:[#allocation6 + $0x190] sm:$0xf]
    %v180 = vld [vmem:[#allocation6 + $0x194] sm:$0xf]
    %v181 = vld [vmem:[#allocation6 + $0x198] sm:$0xf]
    %v182 = vld [vmem:[#allocation6 + $0x19c] sm:$0xf]
    %v183 = vld [vmem:[#allocation6 + $0x1a0] sm:$0xf]
    %v184 = vld [vmem:[#allocation6 + $0x1a4] sm:$0xf]
    %v185 = vld [vmem:[#allocation6 + $0x1a8] sm:$0xf]
    %v186 = vld [vmem:[#allocation6 + $0x1ac] sm:$0xf]
    %v187 = vld [vmem:[#allocation6 + $0x1b0] sm:$0xf]
    %v188 = vld [vmem:[#allocation6 + $0x1b4] sm:$0xf]
    %v189 = vld [vmem:[#allocation6 + $0x1b8] sm:$0xf]
    %v190 = vld [vmem:[#allocation6 + $0x1bc] sm:$0xf]
    %v191 = vld [vmem:[#allocation6 + $0x1c0] sm:$0xf]
    %v192 = vld [vmem:[#allocation6 + $0x1c4] sm:$0xf]
    %v193 = vld [vmem:[#allocation6 + $0x1c8] sm:$0xf]
    %v194 = vld [vmem:[#allocation6 + $0x1cc] sm:$0xf]
    %v195 = vld [vmem:[#allocation6 + $0x1d0] sm:$0xf]
    %v196 = vld [vmem:[#allocation6 + $0x1d4] sm:$0xf]
    %v197 = vld [vmem:[#allocation6 + $0x1d8] sm:$0xf]
    %v198 = vld [vmem:[#allocation6 + $0x1dc] sm:$0xf]
    %v199 = vld [vmem:[#allocation6 + $0x1e0] sm:$0xf]
    %v200 = vld [vmem:[#allocation6 + $0x1e4] sm:$0xf]
    %v201 = vld [vmem:[#allocation6 + $0x1e8] sm:$0xf]
    %v202 = vld [vmem:[#allocation6 + $0x1ec] sm:$0xf]
    %v203 = vld [vmem:[#allocation6 + $0x1f0] sm:$0xf]
    %v204 = vld [vmem:[#allocation6 + $0x1f4] sm:$0xf]
    %v205 = vld [vmem:[#allocation6 + $0x1f8] sm:$0xf]
    %v206 = vld [vmem:[#allocation6 + $0x1fc] sm:$0xf]
    %v215 = vunpack.c.l.b16 %v71
    %v216 = vunpack.c.h.b16 %v71
    %v217 = vunpack.c.l.b16 %v72
    %v218 = vunpack.c.h.b16 %v72
    %v219 = vunpack.c.l.b16 %v73
    %v220 = vunpack.c.h.b16 %v73
    %v221 = vunpack.c.l.b16 %v74
    %v222 = vunpack.c.h.b16 %v74
    %v223 = vunpack.c.l.b16 %v75
    %v224 = vunpack.c.h.b16 %v75
    %v225 = vunpack.c.l.b16 %v76
    %v226 = vunpack.c.h.b16 %v76
    %v227 = vunpack.c.l.b16 %v77
    %v228 = vunpack.c.h.b16 %v77
    %v229 = vunpack.c.l.b16 %v78
    %v230 = vunpack.c.h.b16 %v78
    %v231 = vpack.c.b16 %v223, %v215
    %v232 = vpack.c.b16 %v224, %v216
    %v233 = vpack.c.b16 %v225, %v217
    %v234 = vpack.c.b16 %v226, %v218
    %v235 = vpack.c.b16 %v227, %v219
    %v236 = vpack.c.b16 %v228, %v220
    %v237 = vpack.c.b16 %v229, %v221
    %v238 = vpack.c.b16 %v230, %v222
    %v375 = vunpack.c.l.b16 %v79
    %v376 = vunpack.c.l.b16 %v80
    %v377 = vunpack.c.l.b16 %v81
    %v378 = vunpack.c.l.b16 %v82
    %v379 = vunpack.c.l.b16 %v83
    %v380 = vunpack.c.l.b16 %v84
    %v381 = vunpack.c.l.b16 %v85
    %v382 = vunpack.c.l.b16 %v86
    %v383 = vunpack.c.l.b16 %v87
    %v384 = vunpack.c.l.b16 %v88
    %v385 = vunpack.c.l.b16 %v89
    %v386 = vunpack.c.l.b16 %v90
    %v387 = vunpack.c.l.b16 %v91
    %v388 = vunpack.c.l.b16 %v92
    %v389 = vunpack.c.l.b16 %v93
    %v390 = vunpack.c.l.b16 %v94
    %v391 = vunpack.c.l.b16 %v95
    %v392 = vunpack.c.l.b16 %v96
    %v393 = vunpack.c.l.b16 %v97
    %v394 = vunpack.c.l.b16 %v98
    %v395 = vunpack.c.l.b16 %v99
    %v396 = vunpack.c.l.b16 %v100
    %v397 = vunpack.c.l.b16 %v101
    %v398 = vunpack.c.l.b16 %v102
    %v399 = vunpack.c.l.b16 %v103
    %v400 = vunpack.c.l.b16 %v104
    %v401 = vunpack.c.l.b16 %v105
    %v402 = vunpack.c.l.b16 %v106
    %v403 = vunpack.c.l.b16 %v107
    %v404 = vunpack.c.l.b16 %v108
    %v405 = vunpack.c.l.b16 %v109
    %v406 = vunpack.c.l.b16 %v110
    %v407 = vunpack.c.l.b16 %v111
    %v408 = vunpack.c.l.b16 %v112
    %v409 = vunpack.c.l.b16 %v113
    %v410 = vunpack.c.l.b16 %v114
    %v411 = vunpack.c.l.b16 %v115
    %v412 = vunpack.c.l.b16 %v116
    %v413 = vunpack.c.l.b16 %v117
    %v414 = vunpack.c.l.b16 %v118
    %v415 = vunpack.c.l.b16 %v119
    %v416 = vunpack.c.l.b16 %v120
    %v417 = vunpack.c.l.b16 %v121
    %v418 = vunpack.c.l.b16 %v122
    %v419 = vunpack.c.l.b16 %v123
    %v420 = vunpack.c.l.b16 %v124
    %v421 = vunpack.c.l.b16 %v125
    %v422 = vunpack.c.l.b16 %v126
    %v423 = vunpack.c.l.b16 %v127
    %v424 = vunpack.c.l.b16 %v128
    %v425 = vunpack.c.l.b16 %v129
    %v426 = vunpack.c.l.b16 %v130
    %v427 = vunpack.c.l.b16 %v131
    %v428 = vunpack.c.l.b16 %v132
    %v429 = vunpack.c.l.b16 %v133
    %v430 = vunpack.c.l.b16 %v134
    %v431 = vunpack.c.l.b16 %v135
    %v432 = vunpack.c.l.b16 %v136
    %v433 = vunpack.c.l.b16 %v137
    %v434 = vunpack.c.l.b16 %v138
    %v435 = vunpack.c.l.b16 %v139
    %v436 = vunpack.c.l.b16 %v140
    %v437 = vunpack.c.l.b16 %v141
    %v438 = vunpack.c.l.b16 %v142
    %v439 = vunpack.c.l.b16 %v143
    %v440 = vunpack.c.l.b16 %v144
    %v441 = vunpack.c.l.b16 %v145
    %v442 = vunpack.c.l.b16 %v146
    %v443 = vunpack.c.l.b16 %v147
    %v444 = vunpack.c.l.b16 %v148
    %v445 = vunpack.c.l.b16 %v149
    %v446 = vunpack.c.l.b16 %v150
    %v447 = vunpack.c.l.b16 %v151
    %v448 = vunpack.c.l.b16 %v152
    %v449 = vunpack.c.l.b16 %v153
    %v450 = vunpack.c.l.b16 %v154
    %v451 = vunpack.c.l.b16 %v155
    %v452 = vunpack.c.l.b16 %v156
    %v453 = vunpack.c.l.b16 %v157
    %v454 = vunpack.c.l.b16 %v158
    %v455 = vunpack.c.l.b16 %v159
    %v456 = vunpack.c.l.b16 %v160
    %v457 = vunpack.c.l.b16 %v161
    %v458 = vunpack.c.l.b16 %v162
    %v459 = vunpack.c.l.b16 %v163
    %v460 = vunpack.c.l.b16 %v164
    %v461 = vunpack.c.l.b16 %v165
    %v462 = vunpack.c.l.b16 %v166
    %v463 = vunpack.c.l.b16 %v167
    %v464 = vunpack.c.l.b16 %v168
    %v465 = vunpack.c.l.b16 %v169
    %v466 = vunpack.c.l.b16 %v170
    %v467 = vunpack.c.l.b16 %v171
    %v468 = vunpack.c.l.b16 %v172
    %v469 = vunpack.c.l.b16 %v173
    %v470 = vunpack.c.l.b16 %v174
    %v471 = vunpack.c.l.b16 %v175
    %v472 = vunpack.c.l.b16 %v176
    %v473 = vunpack.c.l.b16 %v177
    %v474 = vunpack.c.l.b16 %v178
    %v475 = vunpack.c.l.b16 %v179
    %v476 = vunpack.c.l.b16 %v180
    %v477 = vunpack.c.l.b16 %v181
    %v478 = vunpack.c.l.b16 %v182
    %v479 = vunpack.c.l.b16 %v183
    %v480 = vunpack.c.l.b16 %v184
    %v481 = vunpack.c.l.b16 %v185
    %v482 = vunpack.c.l.b16 %v186
    %v483 = vunpack.c.l.b16 %v187
    %v484 = vunpack.c.l.b16 %v188
    %v485 = vunpack.c.l.b16 %v189
    %v486 = vunpack.c.l.b16 %v190
    %v487 = vunpack.c.l.b16 %v191
    %v488 = vunpack.c.l.b16 %v192
    %v489 = vunpack.c.l.b16 %v193
    %v490 = vunpack.c.l.b16 %v194
    %v491 = vunpack.c.l.b16 %v195
    %v492 = vunpack.c.l.b16 %v196
    %v493 = vunpack.c.l.b16 %v197
    %v494 = vunpack.c.l.b16 %v198
    %v495 = vunpack.c.l.b16 %v199
    %v496 = vunpack.c.l.b16 %v200
    %v497 = vunpack.c.l.b16 %v201
    %v498 = vunpack.c.l.b16 %v202
    %v499 = vunpack.c.l.b16 %v203
    %v500 = vunpack.c.l.b16 %v204
    %v501 = vunpack.c.l.b16 %v205
    %v502 = vunpack.c.l.b16 %v206
    %v503 = vpack.c.b16 %v376, %v375
    %v504 = vpack.c.b16 %v378, %v377
    %v505 = vpack.c.b16 %v380, %v379
    %v506 = vpack.c.b16 %v382, %v381
    %v507 = vpack.c.b16 %v384, %v383
    %v508 = vpack.c.b16 %v386, %v385
    %v509 = vpack.c.b16 %v388, %v387
    %v510 = vpack.c.b16 %v390, %v389
    %v511 = vpack.c.b16 %v392, %v391
    %v512 = vpack.c.b16 %v394, %v393
    %v513 = vpack.c.b16 %v396, %v395
    %v514 = vpack.c.b16 %v398, %v397
    %v515 = vpack.c.b16 %v400, %v399
    %v516 = vpack.c.b16 %v402, %v401
    %v517 = vpack.c.b16 %v404, %v403
    %v518 = vpack.c.b16 %v406, %v405
    %v519 = vpack.c.b16 %v408, %v407
    %v520 = vpack.c.b16 %v410, %v409
    %v521 = vpack.c.b16 %v412, %v411
    %v522 = vpack.c.b16 %v414, %v413
    %v523 = vpack.c.b16 %v416, %v415
    %v524 = vpack.c.b16 %v418, %v417
    %v525 = vpack.c.b16 %v420, %v419
    %v526 = vpack.c.b16 %v422, %v421
    %v527 = vpack.c.b16 %v424, %v423
    %v528 = vpack.c.b16 %v426, %v425
    %v529 = vpack.c.b16 %v428, %v427
    %v530 = vpack.c.b16 %v430, %v429
    %v531 = vpack.c.b16 %v432, %v431
    %v532 = vpack.c.b16 %v434, %v433
    %v533 = vpack.c.b16 %v436, %v435
    %v534 = vpack.c.b16 %v438, %v437
    %v535 = vpack.c.b16 %v440, %v439
    %v536 = vpack.c.b16 %v442, %v441
    %v537 = vpack.c.b16 %v444, %v443
    %v538 = vpack.c.b16 %v446, %v445
    %v539 = vpack.c.b16 %v448, %v447
    %v540 = vpack.c.b16 %v450, %v449
    %v541 = vpack.c.b16 %v452, %v451
    %v542 = vpack.c.b16 %v454, %v453
    %v543 = vpack.c.b16 %v456, %v455
    %v544 = vpack.c.b16 %v458, %v457
    %v545 = vpack.c.b16 %v460, %v459
    %v546 = vpack.c.b16 %v462, %v461
    %v547 = vpack.c.b16 %v464, %v463
    %v548 = vpack.c.b16 %v466, %v465
    %v549 = vpack.c.b16 %v468, %v467
    %v550 = vpack.c.b16 %v470, %v469
    %v551 = vpack.c.b16 %v472, %v471
    %v552 = vpack.c.b16 %v474, %v473
    %v553 = vpack.c.b16 %v476, %v475
    %v554 = vpack.c.b16 %v478, %v477
    %v555 = vpack.c.b16 %v480, %v479
    %v556 = vpack.c.b16 %v482, %v481
    %v557 = vpack.c.b16 %v484, %v483
    %v558 = vpack.c.b16 %v486, %v485
    %v559 = vpack.c.b16 %v488, %v487
    %v560 = vpack.c.b16 %v490, %v489
    %v561 = vpack.c.b16 %v492, %v491
    %v562 = vpack.c.b16 %v494, %v493
    %v563 = vpack.c.b16 %v496, %v495
    %v564 = vpack.c.b16 %v498, %v497
    %v565 = vpack.c.b16 %v500, %v499
    %v566 = vpack.c.b16 %v502, %v501
    %631 = vmatprep.subr.bf16.mxu0 0
    %632 = vmatpush1.bf16.msra.mxu0 %v503
    %633 = vmatprep.subr.bf16.mxu0 0
    %634 = vmatpush1.bf16.msra.mxu0 %v504
    %635 = vmatprep.subr.bf16.mxu0 0
    %636 = vmatpush1.bf16.msra.mxu0 %v505
    %637 = vmatprep.subr.bf16.mxu0 0
    %638 = vmatpush1.bf16.msra.mxu0 %v506
    %639 = vmatprep.subr.bf16.mxu0 0
    %640 = vmatpush1.bf16.msra.mxu0 %v507
    %641 = vmatprep.subr.bf16.mxu0 0
    %642 = vmatpush1.bf16.msra.mxu0 %v508
    %643 = vmatprep.subr.bf16.mxu0 0
    %644 = vmatpush1.bf16.msra.mxu0 %v509
    %645 = vmatprep.subr.bf16.mxu0 0
    %646 = vmatpush1.bf16.msra.mxu0 %v510
    %647 = vmatprep.subr.bf16.mxu0 0
    %648 = vmatpush1.bf16.msra.mxu0 %v511
    %649 = vmatprep.subr.bf16.mxu0 0
    %650 = vmatpush1.bf16.msra.mxu0 %v512
    %651 = vmatprep.subr.bf16.mxu0 0
    %652 = vmatpush1.bf16.msra.mxu0 %v513
    %653 = vmatprep.subr.bf16.mxu0 0
    %654 = vmatpush1.bf16.msra.mxu0 %v514
    %655 = vmatprep.subr.bf16.mxu0 0
    %656 = vmatpush1.bf16.msra.mxu0 %v515
    %657 = vmatprep.subr.bf16.mxu0 0
    %658 = vmatpush1.bf16.msra.mxu0 %v516
    %659 = vmatprep.subr.bf16.mxu0 0
    %660 = vmatpush1.bf16.msra.mxu0 %v517
    %661 = vmatprep.subr.bf16.mxu0 0
    %662 = vmatpush1.bf16.msra.mxu0 %v518
    %663 = vmatprep.mubr.bf16.mxu0 %v232
    %664 = vmatmul.mubr.bf16.gmra.mrb[0].mxu0 %v231
    %v665 = vpop.f32.mrb[0].mxu0
    %v666 = vadd.f32 0.0, %v665
    %v667 = vpop.f32.mrb[0].mxu0
    %v668 = vpop.f32.mrb[0].mxu0
    %v669 = vadd.f32 0.0, %v668
    %v670 = vpop.f32.mrb[0].mxu0
    %671 = vdwg.mxu0
    %672 = vmatprep.subr.bf16.mxu0 0
    %673 = vmatpush1.bf16.msra.mxu0 %v519
    %674 = vmatprep.subr.bf16.mxu0 0
    %675 = vmatpush1.bf16.msra.mxu0 %v520
    %676 = vmatprep.subr.bf16.mxu0 0
    %677 = vmatpush1.bf16.msra.mxu0 %v521
    %678 = vmatprep.subr.bf16.mxu0 0
    %679 = vmatpush1.bf16.msra.mxu0 %v522
    %680 = vmatprep.subr.bf16.mxu0 0
    %681 = vmatpush1.bf16.msra.mxu0 %v523
    %682 = vmatprep.subr.bf16.mxu0 0
    %683 = vmatpush1.bf16.msra.mxu0 %v524
    %684 = vmatprep.subr.bf16.mxu0 0
    %685 = vmatpush1.bf16.msra.mxu0 %v525
    %686 = vmatprep.subr.bf16.mxu0 0
    %687 = vmatpush1.bf16.msra.mxu0 %v526
    %688 = vmatprep.subr.bf16.mxu0 0
    %689 = vmatpush1.bf16.msra.mxu0 %v527
    %690 = vmatprep.subr.bf16.mxu0 0
    %691 = vmatpush1.bf16.msra.mxu0 %v528
    %692 = vmatprep.subr.bf16.mxu0 0
    %693 = vmatpush1.bf16.msra.mxu0 %v529
    %694 = vmatprep.subr.bf16.mxu0 0
    %695 = vmatpush1.bf16.msra.mxu0 %v530
    %696 = vmatprep.subr.bf16.mxu0 0
    %697 = vmatpush1.bf16.msra.mxu0 %v531
    %698 = vmatprep.subr.bf16.mxu0 0
    %699 = vmatpush1.bf16.msra.mxu0 %v532
    %700 = vmatprep.subr.bf16.mxu0 0
    %701 = vmatpush1.bf16.msra.mxu0 %v533
    %702 = vmatprep.subr.bf16.mxu0 0
    %703 = vmatpush1.bf16.msra.mxu0 %v534
    %704 = vmatprep.mubr.bf16.mxu0 %v234
    %705 = vmatmul.mubr.bf16.gmra.mrb[0].mxu0 %v233
    %v706 = vpop.f32.mrb[0].mxu0
    %v707 = vadd.f32 %v666, %v706
    %v708 = vpop.f32.mrb[0].mxu0
    %v709 = vpop.f32.mrb[0].mxu0
    %v710 = vadd.f32 %v669, %v709
    %v711 = vpop.f32.mrb[0].mxu0
    %712 = vdwg.mxu0
    %713 = vmatprep.subr.bf16.mxu0 0
    %714 = vmatpush1.bf16.msra.mxu0 %v535
    %715 = vmatprep.subr.bf16.mxu0 0
    %716 = vmatpush1.bf16.msra.mxu0 %v536
    %717 = vmatprep.subr.bf16.mxu0 0
    %718 = vmatpush1.bf16.msra.mxu0 %v537
    %719 = vmatprep.subr.bf16.mxu0 0
    %720 = vmatpush1.bf16.msra.mxu0 %v538
    %721 = vmatprep.subr.bf16.mxu0 0
    %722 = vmatpush1.bf16.msra.mxu0 %v539
    %723 = vmatprep.subr.bf16.mxu0 0
    %724 = vmatpush1.bf16.msra.mxu0 %v540
    %725 = vmatprep.subr.bf16.mxu0 0
    %726 = vmatpush1.bf16.msra.mxu0 %v541
    %727 = vmatprep.subr.bf16.mxu0 0
    %728 = vmatpush1.bf16.msra.mxu0 %v542
    %729 = vmatprep.subr.bf16.mxu0 0
    %730 = vmatpush1.bf16.msra.mxu0 %v543
    %731 = vmatprep.subr.bf16.mxu0 0
    %732 = vmatpush1.bf16.msra.mxu0 %v544
    %733 = vmatprep.subr.bf16.mxu0 0
    %734 = vmatpush1.bf16.msra.mxu0 %v545
    %735 = vmatprep.subr.bf16.mxu0 0
    %736 = vmatpush1.bf16.msra.mxu0 %v546
    %737 = vmatprep.subr.bf16.mxu0 0
    %738 = vmatpush1.bf16.msra.mxu0 %v547
    %739 = vmatprep.subr.bf16.mxu0 0
    %740 = vmatpush1.bf16.msra.mxu0 %v548
    %741 = vmatprep.subr.bf16.mxu0 0
    %742 = vmatpush1.bf16.msra.mxu0 %v549
    %743 = vmatprep.subr.bf16.mxu0 0
    %744 = vmatpush1.bf16.msra.mxu0 %v550
    %745 = vmatprep.mubr.bf16.mxu0 %v236
    %746 = vmatmul.mubr.bf16.gmra.mrb[0].mxu0 %v235
    %v747 = vpop.f32.mrb[0].mxu0
    %v748 = vadd.f32 %v707, %v747
    %v749 = vpop.f32.mrb[0].mxu0
    %v750 = vpop.f32.mrb[0].mxu0
    %v751 = vadd.f32 %v710, %v750
    %v752 = vpop.f32.mrb[0].mxu0
    %753 = vdwg.mxu0
    %754 = vmatprep.subr.bf16.mxu0 0
    %755 = vmatpush1.bf16.msra.mxu0 %v551
    %756 = vmatprep.subr.bf16.mxu0 0
    %757 = vmatpush1.bf16.msra.mxu0 %v552
    %758 = vmatprep.subr.bf16.mxu0 0
    %759 = vmatpush1.bf16.msra.mxu0 %v553
    %760 = vmatprep.subr.bf16.mxu0 0
    %761 = vmatpush1.bf16.msra.mxu0 %v554
    %762 = vmatprep.subr.bf16.mxu0 0
    %763 = vmatpush1.bf16.msra.mxu0 %v555
    %764 = vmatprep.subr.bf16.mxu0 0
    %765 = vmatpush1.bf16.msra.mxu0 %v556
    %766 = vmatprep.subr.bf16.mxu0 0
    %767 = vmatpush1.bf16.msra.mxu0 %v557
    %768 = vmatprep.subr.bf16.mxu0 0
    %769 = vmatpush1.bf16.msra.mxu0 %v558
    %770 = vmatprep.subr.bf16.mxu0 0
    %771 = vmatpush1.bf16.msra.mxu0 %v559
    %772 = vmatprep.subr.bf16.mxu0 0
    %773 = vmatpush1.bf16.msra.mxu0 %v560
    %774 = vmatprep.subr.bf16.mxu0 0
    %775 = vmatpush1.bf16.msra.mxu0 %v561
    %776 = vmatprep.subr.bf16.mxu0 0
    %777 = vmatpush1.bf16.msra.mxu0 %v562
    %778 = vmatprep.subr.bf16.mxu0 0
    %779 = vmatpush1.bf16.msra.mxu0 %v563
    %780 = vmatprep.subr.bf16.mxu0 0
    %781 = vmatpush1.bf16.msra.mxu0 %v564
    %782 = vmatprep.subr.bf16.mxu0 0
    %783 = vmatpush1.bf16.msra.mxu0 %v565
    %784 = vmatprep.subr.bf16.mxu0 0
    %785 = vmatpush1.bf16.msra.mxu0 %v566
    %786 = vmatprep.mubr.bf16.mxu0 %v238
    %787 = vmatmul.mubr.bf16.gmra.mrb[0].mxu0 %v237
    %v788 = vpop.f32.mrb[0].mxu0
    %v789 = vadd.f32 %v748, %v788
    %v790 = vpop.f32.mrb[0].mxu0
    %v791 = vpop.f32.mrb[0].mxu0
    %v792 = vadd.f32 %v751, %v791
    %v793 = vpop.f32.mrb[0].mxu0
    %794 = vdwg.mxu0
    %v795 = vadd.f32 %v69, %v789
    %v796 = vadd.f32 %v70, %v792
    %797 = vst [vmem:[#allocation2] sm:$0xff] %v795
    %798 = vst [vmem:[#allocation2 + $0x8] sm:$0xff] %v796
    // Predicated region
    $region38: #{tpu_custom_call.1} parent=1 // pred_check
      %p799 = pneg %p63
    $region39: #{tpu_custom_call.1} parent=1 // pred_check_branch
      %801 = sbr.rel (%p799) target = $region41
    $region40: #{tpu_custom_call.1} parent=1 // pred_region
      %v802 = vld [vmem:[#allocation2] sm:$0xff]
      %v803 = vld [vmem:[#allocation2 + $0x8] sm:$0xff]
      %v804 = vld [vmem:[%s2] sm:$0x1]
      %v806 = vlaneseq
      %v807 = vshrl.u32 %v806, 7
      %v808 = vsub.s32 0, %v807
      %v809 = vrot.slane %v804, %v808
      %v811 = vadd.f32 %v802, %v809
      %v812 = vadd.f32 %v803, %v809
      %v813 = vadd.f32 %v811, 0.0
      %v814 = vadd.f32 %v812, 0.0
      %vm815 = vcmp.ge.f32.partialorder %v813, 1.0
      %vm816 = vcmp.ge.f32.partialorder %v814, 1.0
      %v817 = vsel %vm815, 1, 0
      %v818 = vsel %vm816, 1, 0
      %v819 = vcvt.s32.f32 %v817
      %v820 = vcvt.s32.f32 %v818
      %v821 = vsub.f32 %v813, %v819
      %v822 = vsub.f32 %v814, %v820
      %v823 = vadd.f32 %v819, 0.0
      %v824 = vadd.f32 %v820, 0.0
      %v825 = vmul.f32 %v821, 0.9
      %v826 = vmul.f32 %v822, 0.9
      %v827 = vadd.f32 %v825, %v811
      %v828 = vadd.f32 %v826, %v812
      %vm829 = vcmp.ge.f32.partialorder %v827, 1.0
      %vm830 = vcmp.ge.f32.partialorder %v828, 1.0
      %v831 = vsel %vm829, 1, 0
      %v832 = vsel %vm830, 1, 0
      %v833 = vcvt.s32.f32 %v831
      %v834 = vcvt.s32.f32 %v832
      %v835 = vsub.f32 %v827, %v833
      %v836 = vsub.f32 %v828, %v834
      %v837 = vadd.f32 %v823, %v833
      %v838 = vadd.f32 %v824, %v834
      %v839 = vmul.f32 %v835, 0.9
      %v840 = vmul.f32 %v836, 0.9
      %v841 = vadd.f32 %v839, %v811
      %v842 = vadd.f32 %v840, %v812
      %vm843 = vcmp.ge.f32.partialorder %v841, 1.0
      %vm844 = vcmp.ge.f32.partialorder %v842, 1.0
      %v845 = vsel %vm843, 1, 0
      %v846 = vsel %vm844, 1, 0
      %v847 = vcvt.s32.f32 %v845
      %v848 = vcvt.s32.f32 %v846
      %v849 = vsub.f32 %v841, %v847
      %v850 = vsub.f32 %v842, %v848
      %v851 = vadd.f32 %v837, %v847
      %v852 = vadd.f32 %v838, %v848
      %v853 = vmul.f32 %v849, 0.9
      %v854 = vmul.f32 %v850, 0.9
      %v855 = vadd.f32 %v853, %v811
      %v856 = vadd.f32 %v854, %v812
      %vm857 = vcmp.ge.f32.partialorder %v855, 1.0
      %vm858 = vcmp.ge.f32.partialorder %v856, 1.0
      %v859 = vsel %vm857, 1, 0
      %v860 = vsel %vm858, 1, 0
      %v861 = vcvt.s32.f32 %v859
      %v862 = vcvt.s32.f32 %v860
      %v863 = vsub.f32 %v855, %v861
      %v864 = vsub.f32 %v856, %v862
      %v865 = vadd.f32 %v851, %v861
      %v866 = vadd.f32 %v852, %v862
      %v867 = vmul.f32 %v863, 0.9
      %v868 = vmul.f32 %v864, 0.9
      %v869 = vadd.f32 %v867, %v811
      %v870 = vadd.f32 %v868, %v812
      %vm871 = vcmp.ge.f32.partialorder %v869, 1.0
      %vm872 = vcmp.ge.f32.partialorder %v870, 1.0
      %v873 = vsel %vm871, 1, 0
      %v874 = vsel %vm872, 1, 0
      %v875 = vcvt.s32.f32 %v873
      %v876 = vcvt.s32.f32 %v874
      %v877 = vsub.f32 %v869, %v875
      %v878 = vsub.f32 %v870, %v876
      %v879 = vadd.f32 %v865, %v875
      %v880 = vadd.f32 %v866, %v876
      %v881 = vmul.f32 %v877, 0.9
      %v882 = vmul.f32 %v878, 0.9
      %v883 = vadd.f32 %v881, %v811
      %v884 = vadd.f32 %v882, %v812
      %vm885 = vcmp.ge.f32.partialorder %v883, 1.0
      %vm886 = vcmp.ge.f32.partialorder %v884, 1.0
      %v887 = vsel %vm885, 1, 0
      %v888 = vsel %vm886, 1, 0
      %v889 = vcvt.s32.f32 %v887
      %v890 = vcvt.s32.f32 %v888
      %v891 = vsub.f32 %v883, %v889
      %v892 = vsub.f32 %v884, %v890
      %v893 = vadd.f32 %v879, %v889
      %v894 = vadd.f32 %v880, %v890
      %v895 = vmul.f32 %v891, 0.9
      %v896 = vmul.f32 %v892, 0.9
      %v897 = vadd.f32 %v895, %v811
      %v898 = vadd.f32 %v896, %v812
      %vm899 = vcmp.ge.f32.partialorder %v897, 1.0
      %vm900 = vcmp.ge.f32.partialorder %v898, 1.0
      %v901 = vsel %vm899, 1, 0
      %v902 = vsel %vm900, 1, 0
      %v903 = vcvt.s32.f32 %v901
      %v904 = vcvt.s32.f32 %v902
      %v905 = vsub.f32 %v897, %v903
      %v906 = vsub.f32 %v898, %v904
      %v907 = vadd.f32 %v893, %v903
      %v908 = vadd.f32 %v894, %v904
      %v909 = vmul.f32 %v905, 0.9
      %v910 = vmul.f32 %v906, 0.9
      %v911 = vadd.f32 %v909, %v811
      %v912 = vadd.f32 %v910, %v812
      %vm913 = vcmp.ge.f32.partialorder %v911, 1.0
      %vm914 = vcmp.ge.f32.partialorder %v912, 1.0
      %v915 = vsel %vm913, 1, 0
      %v916 = vsel %vm914, 1, 0
      %v917 = vcvt.s32.f32 %v915
      %v918 = vcvt.s32.f32 %v916
      %v919 = vadd.f32 %v907, %v917
      %v920 = vadd.f32 %v908, %v918
      %v921 = vmul.f32 %v919, 0.125
      %v922 = vmul.f32 %v920, 0.125
      %v923 = vpack.c.bf16 %v922, %v921
      %v924 = vld [vmem:[#allocation8] sm:$0xf]
      %v925 = vld [vmem:[#allocation8 + $0x4] sm:$0xf]
      %v926 = vld [vmem:[#allocation8 + $0x8] sm:$0xf]
      %v927 = vld [vmem:[#allocation8 + $0xc] sm:$0xf]
      %v928 = vld [vmem:[#allocation8 + $0x10] sm:$0xf]
      %v929 = vld [vmem:[#allocation8 + $0x14] sm:$0xf]
      %v930 = vld [vmem:[#allocation8 + $0x18] sm:$0xf]
      %v931 = vld [vmem:[#allocation8 + $0x1c] sm:$0xf]
      %v932 = vld [vmem:[#allocation8 + $0x20] sm:$0xf]
      %v933 = vld [vmem:[#allocation8 + $0x24] sm:$0xf]
      %v934 = vld [vmem:[#allocation8 + $0x28] sm:$0xf]
      %v935 = vld [vmem:[#allocation8 + $0x2c] sm:$0xf]
      %v936 = vld [vmem:[#allocation8 + $0x30] sm:$0xf]
      %v937 = vld [vmem:[#allocation8 + $0x34] sm:$0xf]
      %v938 = vld [vmem:[#allocation8 + $0x38] sm:$0xf]
      %v939 = vld [vmem:[#allocation8 + $0x3c] sm:$0xf]
      %v940 = vld [vmem:[%s4] sm:$0x1]
      %v942 = vlaneseq
      %v943 = vshrl.u32 %v942, 7
      %v944 = vsub.s32 0, %v943
      %v945 = vrot.slane %v940, %v944
      %v963 = vunpack.c.l.b16 %v924
      %v964 = vunpack.c.l.b16 %v925
      %v965 = vunpack.c.l.b16 %v926
      %v966 = vunpack.c.l.b16 %v927
      %v967 = vunpack.c.l.b16 %v928
      %v968 = vunpack.c.l.b16 %v929
      %v969 = vunpack.c.l.b16 %v930
      %v970 = vunpack.c.l.b16 %v931
      %v971 = vunpack.c.l.b16 %v932
      %v972 = vunpack.c.l.b16 %v933
      %v973 = vunpack.c.l.b16 %v934
      %v974 = vunpack.c.l.b16 %v935
      %v975 = vunpack.c.l.b16 %v936
      %v976 = vunpack.c.l.b16 %v937
      %v977 = vunpack.c.l.b16 %v938
      %v978 = vunpack.c.l.b16 %v939
      %v979 = vpack.c.b16 %v964, %v963
      %v980 = vpack.c.b16 %v966, %v965
      %v981 = vpack.c.b16 %v968, %v967
      %v982 = vpack.c.b16 %v970, %v969
      %v983 = vpack.c.b16 %v972, %v971
      %v984 = vpack.c.b16 %v974, %v973
      %v985 = vpack.c.b16 %v976, %v975
      %v986 = vpack.c.b16 %v978, %v977
      %995 = vmatprep.subr.bf16.mxu0 0
      %996 = vmatpush1.bf16.msra.mxu0 %v979
      %997 = vmatprep.subr.bf16.mxu0 0
      %998 = vmatpush1.bf16.msra.mxu0 %v980
      %999 = vmatprep.subr.bf16.mxu0 0
      %1000 = vmatpush1.bf16.msra.mxu0 %v981
      %1001 = vmatprep.subr.bf16.mxu0 0
      %1002 = vmatpush1.bf16.msra.mxu0 %v982
      %1003 = vmatprep.subr.bf16.mxu0 0
      %1004 = vmatpush1.bf16.msra.mxu0 %v983
      %1005 = vmatprep.subr.bf16.mxu0 0
      %1006 = vmatpush1.bf16.msra.mxu0 %v984
      %1007 = vmatprep.subr.bf16.mxu0 0
      %1008 = vmatpush1.bf16.msra.mxu0 %v985
      %1009 = vmatprep.subr.bf16.mxu0 0
      %1010 = vmatpush1.bf16.msra.mxu0 %v986
      %1011 = vmatprep.subr.bf16.mxu0 0
      %1012 = vmatpush1.bf16.msra.mxu0 0
      %1013 = vmatprep.subr.bf16.mxu0 0
      %1014 = vmatpush1.bf16.msra.mxu0 0
      %1015 = vmatprep.subr.bf16.mxu0 0
      %1016 = vmatpush1.bf16.msra.mxu0 0
      %1017 = vmatprep.subr.bf16.mxu0 0
      %1018 = vmatpush1.bf16.msra.mxu0 0
      %1019 = vmatprep.subr.bf16.mxu0 0
      %1020 = vmatpush1.bf16.msra.mxu0 0
      %1021 = vmatprep.subr.bf16.mxu0 0
      %1022 = vmatpush1.bf16.msra.mxu0 0
      %1023 = vmatprep.subr.bf16.mxu0 0
      %1024 = vmatpush1.bf16.msra.mxu0 0
      %1025 = vmatprep.subr.bf16.mxu0 0
      %1026 = vmatpush1.bf16.msra.mxu0 0
      %1027 = vmatprep.mubr.bf16.mxu0 0
      %1028 = vmatmul.mubr.bf16.gmra.mrb[0].mxu0 %v923
      %v1029 = vpop.f32.mrb[0].mxu0
      %v1030 = vadd.f32 %v945, %v1029
      %v1031 = vpop.f32.mrb[0].mxu0
      %v1032 = vpop.f32.mrb[0].mxu0
      %v1033 = vadd.f32 %v945, %v1032
      %v1034 = vpop.f32.mrb[0].mxu0
      %1035 = vdwg.mxu0
      %1036 = vmax.xlane.f32.xlu0 %v1030
      %v1037 = vpop.xlane.xlu0 %1036
      %1038 = vmax.xlane.f32.xlu0 %v1033
      %v1039 = vpop.xlane.xlu0 %1038
      %v1040 = vsub.f32 %v1030, %v1037
      %v1041 = vsub.f32 %v1033, %v1039
      %v1042 = vmul.f32 %v1040, 1.442695
      %v1043 = vpow.pop %v1042
      %v1044 = vmul.f32 %v1041, 1.442695
      %v1045 = vpow.pop %v1044
      %1046 = vadd.xlane.f32.xlu0 %v1043
      %v1047 = vpop.xlane.xlu0 %1046
      %1048 = vadd.xlane.f32.xlu0 %v1045
      %v1049 = vpop.xlane.xlu0 %1048
      %v1050 = vlog2.pop %v1047
      %v1051 = vmul.f32 %v1050, 0.6931472
      %v1052 = vlog2.pop %v1049
      %v1053 = vmul.f32 %v1052, 0.6931472
      %v1054 = vsub.f32 %v1040, %v1051
      %v1055 = vsub.f32 %v1041, %v1053
      %1056 = vst [vmem:[#allocation9] sm:$0xff] %v1054
      %1057 = vst [vmem:[#allocation9 + $0x8] sm:$0xff] %v1055
    $region41: #{tpu_custom_call.1} parent=1 // pred_fallthru
      _
    // Predicated region
    $region42: #{tpu_custom_call.1} parent=1 // pred_check
      _
    $region43: #{tpu_custom_call.1} parent=1 // pred_check_branch
      %1059 = sbr.rel (0) target = $region45
    $region44: #{tpu_custom_call.1} parent=1 // pred_region
      %s1061 = ssub.s32 256, 256
      %1062 = vsyncadd [#allocation5], %s1061
      %s1063 = sshll.u32 [#allocation9], 4
      %s1064 = int_to_ptr.vmem [resolvable:$true] %s1063
      %1069 = dma.vmem_to_hbm [thread:$0]  %s1064, 256, %s5, [#allocation5], 128, 128, 8
    $region45: #{tpu_custom_call.1} parent=1 // pred_fallthru
      _
    // Predicated region
    $region46: #{tpu_custom_call.1} parent=1 // pred_check
      _
    $region47: #{tpu_custom_call.1} parent=1 // pred_check_branch
      %1071 = sbr.rel (0) target = $region49
    $region48: #{tpu_custom_call.1} parent=1 // pred_region
      %1072 = dma.done [#allocation5], 256
    $region49: #{tpu_custom_call.1} parent=1 // pred_fallthru
      _
    %1073 = vsyncpa [#allocation4], 1
    %1074 = vsyncpa [#allocation7], 1
    %1075 = vsyncpa [#allocation5], 1

</llo_original>
